<compile_context>
chip_gen: v7x
topology: tpu7x:2x2x1
jax: 0.10.0
libtpu: 0.0.40
codegen_flags: <defaults>
</compile_context>

<pallas_src>
import functools
import numpy as np
import jax
import jax.numpy as jnp
from jax import lax
from jax.experimental import pallas as pl
from jax.experimental.pallas import tpu as pltpu

SIGMA_MIN = 0.01
SIGMA_MAX = 10.0

_LANE_TILE_CAP = 32768   # lanes per grid-level spatial tile
_LANE_CHUNK = 512        # lanes per in-kernel chunk (keeps temps in vregs)


def _spatial_tile(hw, cap=_LANE_TILE_CAP):
    """Grid-level spatial tile: full HW if it fits under cap, else the largest
    multiple of 128 <= cap that divides HW (lane-dense, unmasked stores)."""
    if hw <= cap:
        return hw
    for t in range(cap - cap % 128, 127, -128):
        if hw % t == 0:
            return t
    return hw  # fallback: untiled (block == full dim is always legal)


def _lane_chunk(t, cap=_LANE_CHUNK):
    """In-kernel chunk: largest multiple of 128 <= cap dividing the tile."""
    if t <= cap:
        return t
    for c in range(cap - cap % 128, 127, -128):
        if t % c == 0:
            return c
    return t


def _score_kernel(inv_sigma_ref, x_ref, w1_ref, w2_ref, temb_ref, b2_ref,
                  o_ref, *, n_chunks, chunk):
    b = pl.program_id(0)

    w1 = w1_ref[...]                       # (Hd, C)  f32
    temb = temb_ref[0]                     # (Hd, 1)  f32, conv1 bias folded in
    c_in = w1.shape[1]

    # Fold 1/sigma(t) into the second conv's weight and bias once per grid
    # step (tiny (C, Hd) / (C, 1) multiplies) -> epilogue is dot + add only.
    inv_s = inv_sigma_ref[b]               # scalar from SMEM
    w2 = w2_ref[...] * inv_s               # (C, Hd)
    b2 = b2_ref[...] * inv_s               # (C, 1)

    def one_chunk(off):
        x = x_ref[0, :, pl.ds(off, chunk)].astype(jnp.float32)       # (C, Tc)
        # First 1x1 conv: K = C is tiny -> C broadcast FMAs on the VPU
        # instead of padding the MXU with a K=4 contraction.
        h = w1[:, 0:1] * x[0:1, :]                                   # (Hd, Tc)
        for c in range(1, c_in):
            h = h + w1[:, c:c + 1] * x[c:c + 1, :]
        h = h + temb                                                 # time cond.
        h = h * jax.nn.sigmoid(h)                                    # SiLU (EUP)
        # Second 1x1 conv: K = hidden -> MXU.  1/sigma already folded in.
        out = jnp.dot(w2, h, preferred_element_type=jnp.float32) + b2
        o_ref[0, :, pl.ds(off, chunk)] = out.astype(o_ref.dtype)

    if n_chunks == 1:
        one_chunk(0)
    else:
        def body(i, _):
            one_chunk(pl.multiple_of(i * chunk, 128))
            return ()
        lax.fori_loop(0, n_chunks, body, ())


def make_params(key, c, hidden, n_freqs=8):
    ks = jax.random.split(key, 6)
    freqs = jax.random.normal(ks[0], (n_freqs,), jnp.float32) * 4.0   # Fourier scales
    wt = jax.random.normal(ks[1], (2 * n_freqs, hidden), jnp.float32) * 0.1
    bt = jax.random.normal(ks[2], (hidden,), jnp.float32) * 0.01
    w1 = jax.random.normal(ks[3], (hidden, c), jnp.float32) * 0.2     # conv1 1x1 weight
    b1 = jnp.zeros((hidden,), jnp.float32)
    w2 = jax.random.normal(ks[4], (c, hidden), jnp.float32) * 0.2     # conv2 1x1 weight
    b2 = jax.random.normal(ks[5], (c,), jnp.float32) * 0.01
    return dict(freqs=freqs, wt=wt, bt=bt, w1=w1, b1=b1, w2=w2, b2=b2)


@jax.jit
def score_forward(t, x, params):
    """forward(t, x) of the score model.  t: (B,), x: (B, C, H, W) NCHW."""
    B, C, H, W = x.shape
    HW = H * W
    hidden = params["w1"].shape[0]

    T = _spatial_tile(HW)
    nt = HW // T
    chunk = _lane_chunk(T)
    n_chunks = T // chunk

    # Keep x in its native dtype (free reshape of a contiguous NCHW tensor);
    # the kernel casts per chunk.
    x3 = x.reshape(B, C, HW)

    # --- glue: Gaussian-Fourier time embedding + dense projection (tiny) ---
    tf = t.astype(jnp.float32)
    ang = 2.0 * jnp.pi * tf[:, None] * params["freqs"][None, :]          # (B, F)
    emb = jnp.concatenate([jnp.sin(ang), jnp.cos(ang)], axis=-1)         # (B, 2F)
    temb = emb @ params["wt"] + params["bt"] + params["b1"]              # (B, Hd), conv1 bias folded in
    temb = temb[:, :, None].astype(jnp.float32)                          # (B, Hd, 1)

    b2 = params["b2"][:, None]                                           # (C, 1)

    # VE SDE: sigma(t) = sigma_min * (sigma_max / sigma_min) ** t  -> 1/sigma
    log_smin = jnp.float32(np.log(SIGMA_MIN))
    log_ratio = jnp.float32(np.log(SIGMA_MAX / SIGMA_MIN))
    inv_sigma = jnp.exp(-(log_smin + tf * log_ratio))                    # (B,)

    kernel = functools.partial(_score_kernel, n_chunks=n_chunks, chunk=chunk)

    out = pl.pallas_call(
        kernel,
        out_shape=jax.ShapeDtypeStruct((B, C, HW), x.dtype),
        grid_spec=pltpu.PrefetchScalarGridSpec(
            num_scalar_prefetch=0,
            grid=(B, nt),
            in_specs=[
                pl.BlockSpec(memory_space=pltpu.SMEM),                    # inv_sigma (B,)
                pl.BlockSpec((1, C, T), lambda b, s: (b, 0, s)),          # x  (B, C, HW)
                pl.BlockSpec((hidden, C), lambda b, s: (0, 0)),           # W1
                pl.BlockSpec((C, hidden), lambda b, s: (0, 0)),           # W2
                pl.BlockSpec((1, hidden, 1), lambda b, s: (b, 0, 0)),     # temb
                pl.BlockSpec((C, 1), lambda b, s: (0, 0)),                # b2
            ],
            out_specs=pl.BlockSpec((1, C, T), lambda b, s: (b, 0, s)),
        ),
        compiler_params=pltpu.CompilerParams(
            dimension_semantics=("parallel", "parallel"),
            vmem_limit_bytes=32 * 1024 * 1024),
    )(inv_sigma, x3, params["w1"], params["w2"], temb, b2)

    return out.reshape(B, C, H, W)


def score_forward_ref(t, x, params):
    """Pure-JAX reference of the same forward pass."""
    B, C, H, W = x.shape
    x3 = x.reshape(B, C, H * W).astype(jnp.float32)
    ang = 2.0 * jnp.pi * t[:, None] * params["freqs"][None, :]
    emb = jnp.concatenate([jnp.sin(ang), jnp.cos(ang)], axis=-1)
    temb = emb @ params["wt"] + params["bt"] + params["b1"]
    h = jnp.einsum("hc,bcs->bhs", params["w1"], x3) + temb[:, :, None]
    h = h * jax.nn.sigmoid(h)
    out = jnp.einsum("ch,bhs->bcs", params["w2"], h) + params["b2"][None, :, None]
    sigma = SIGMA_MIN * (SIGMA_MAX / SIGMA_MIN) ** t
    out = out / sigma[:, None, None]
    return out.reshape(B, C, H, W).astype(x.dtype)


if __name__ == "__main__":
    key = jax.random.PRNGKey(0)
    k_param, k_x, k_t = jax.random.split(key, 3)

    B, C, H, W = 2, 4, 16, 16
    hidden = 32

    params = make_params(k_param, C, hidden)
    x = jax.random.normal(k_x, (B, C, H, W), jnp.float32)
    t = jax.random.uniform(k_t, (B,), jnp.float32, minval=0.1, maxval=1.0)

    y = score_forward(t, x, params)
    y = jax.block_until_ready(y)

    y_ref = score_forward_ref(t, x, params)
    assert y.shape == (B, C, H, W)
    assert jnp.allclose(y, y_ref, atol=1e-4, rtol=1e-4), "Pallas output mismatch vs reference"

    # TODO(synk): sample()/log_likelihood()/fit()/divergence() are SDE-integration
    # / training loops (optimizer, EMA, Hutchinson VJPs, checkpoint I/O) and are
    # not kernel material.
    print("KERNEL_OK")
</pallas_src>

<mosaic_0001>
module attributes {stable_mosaic.version = 11 : i64} {
  func.func @_score_kernel(%arg0: i32, %arg1: i32, %arg2: memref<2xf32, #tpu.memory_space<smem>>, %arg3: memref<1x4x256xf32, #tpu.memory_space<vmem>>, %arg4: memref<32x4xf32, #tpu.memory_space<vmem>>, %arg5: memref<4x32xf32, #tpu.memory_space<vmem>>, %arg6: memref<1x32x1xf32, #tpu.memory_space<vmem>>, %arg7: memref<4x1xf32, #tpu.memory_space<vmem>>, %arg8: memref<1x4x256xf32, #tpu.memory_space<vmem>>) attributes {dimension_semantics = [#tpu.dimension_semantics<parallel>, #tpu.dimension_semantics<parallel>], iteration_bounds = array<i64: 2, 1>, scalar_prefetch = 0 : i64, scratch_operands = 0 : i64, tpu.core_type = #tpu.core_type<tc>, window_params = [{transform_indices = @transform_0, window_bounds = array<i64: 2>}, {transform_indices = @transform_1, window_bounds = array<i64: 1, 4, 256>}, {pipeline_mode = #tpu.pipeline_mode<synchronous>, transform_indices = @transform_2, window_bounds = array<i64: 32, 4>}, {pipeline_mode = #tpu.pipeline_mode<synchronous>, transform_indices = @transform_3, window_bounds = array<i64: 4, 32>}, {transform_indices = @transform_4, window_bounds = array<i64: 1, 32, 1>}, {pipeline_mode = #tpu.pipeline_mode<synchronous>, transform_indices = @transform_5, window_bounds = array<i64: 4, 1>}, {transform_indices = @transform_6, window_bounds = array<i64: 1, 4, 256>}]} {
    %c0 = arith.constant 0 : index
    %c0_0 = arith.constant 0 : index
    %0 = vector.load %arg4[%c0, %c0_0] : memref<32x4xf32, #tpu.memory_space<vmem>>, vector<32x4xf32>
    %c0_1 = arith.constant 0 : index
    %c0_2 = arith.constant 0 : index
    %c0_3 = arith.constant 0 : index
    %1 = vector.load %arg6[%c0_1, %c0_2, %c0_3] : memref<1x32x1xf32, #tpu.memory_space<vmem>>, vector<1x32x1xf32>
    %2 = vector.shape_cast %1 : vector<1x32x1xf32> to vector<32x1xf32>
    %3 = arith.index_cast %arg0 : i32 to index
    %4 = memref.load %arg2[%3] : memref<2xf32, #tpu.memory_space<smem>>
    %c0_4 = arith.constant 0 : index
    %c0_5 = arith.constant 0 : index
    %5 = vector.load %arg5[%c0_4, %c0_5] : memref<4x32xf32, #tpu.memory_space<vmem>>, vector<4x32xf32>
    %6 = vector.broadcast %4 : f32 to vector<4x32xf32>
    %7 = arith.mulf %5, %6 : vector<4x32xf32>
    %c0_6 = arith.constant 0 : index
    %c0_7 = arith.constant 0 : index
    %8 = vector.load %arg7[%c0_6, %c0_7] : memref<4x1xf32, #tpu.memory_space<vmem>>, vector<4x1xf32>
    %9 = vector.broadcast %4 : f32 to vector<4x1xf32>
    %10 = arith.mulf %8, %9 : vector<4x1xf32>
    %c0_8 = arith.constant 0 : index
    %c0_9 = arith.constant 0 : index
    %c0_10 = arith.constant 0 : index
    %11 = vector.load %arg3[%c0_8, %c0_9, %c0_10] : memref<1x4x256xf32, #tpu.memory_space<vmem>>, vector<1x4x256xf32>
    %12 = vector.shape_cast %11 : vector<1x4x256xf32> to vector<4x256xf32>
    %13 = vector.extract_strided_slice %0 {offsets = [0, 0], sizes = [32, 1], strides = [1, 1]} : vector<32x4xf32> to vector<32x1xf32>
    %14 = vector.extract_strided_slice %12 {offsets = [0, 0], sizes = [1, 256], strides = [1, 1]} : vector<4x256xf32> to vector<1x256xf32>
    %15 = vector.broadcast %13 : vector<32x1xf32> to vector<32x256xf32>
    %16 = vector.broadcast %14 : vector<1x256xf32> to vector<32x256xf32>
    %17 = arith.mulf %15, %16 : vector<32x256xf32>
    %18 = vector.extract_strided_slice %0 {offsets = [0, 1], sizes = [32, 1], strides = [1, 1]} : vector<32x4xf32> to vector<32x1xf32>
    %19 = vector.extract_strided_slice %12 {offsets = [1, 0], sizes = [1, 256], strides = [1, 1]} : vector<4x256xf32> to vector<1x256xf32>
    %20 = vector.broadcast %18 : vector<32x1xf32> to vector<32x256xf32>
    %21 = vector.broadcast %19 : vector<1x256xf32> to vector<32x256xf32>
    %22 = arith.mulf %20, %21 : vector<32x256xf32>
    %23 = arith.addf %17, %22 : vector<32x256xf32>
    %24 = vector.extract_strided_slice %0 {offsets = [0, 2], sizes = [32, 1], strides = [1, 1]} : vector<32x4xf32> to vector<32x1xf32>
    %25 = vector.extract_strided_slice %12 {offsets = [2, 0], sizes = [1, 256], strides = [1, 1]} : vector<4x256xf32> to vector<1x256xf32>
    %26 = vector.broadcast %24 : vector<32x1xf32> to vector<32x256xf32>
    %27 = vector.broadcast %25 : vector<1x256xf32> to vector<32x256xf32>
    %28 = arith.mulf %26, %27 : vector<32x256xf32>
    %29 = arith.addf %23, %28 : vector<32x256xf32>
    %30 = vector.extract_strided_slice %0 {offsets = [0, 3], sizes = [32, 1], strides = [1, 1]} : vector<32x4xf32> to vector<32x1xf32>
    %31 = vector.extract_strided_slice %12 {offsets = [3, 0], sizes = [1, 256], strides = [1, 1]} : vector<4x256xf32> to vector<1x256xf32>
    %32 = vector.broadcast %30 : vector<32x1xf32> to vector<32x256xf32>
    %33 = vector.broadcast %31 : vector<1x256xf32> to vector<32x256xf32>
    %34 = arith.mulf %32, %33 : vector<32x256xf32>
    %35 = arith.addf %29, %34 : vector<32x256xf32>
    %36 = vector.broadcast %2 : vector<32x1xf32> to vector<32x256xf32>
    %37 = arith.addf %35, %36 : vector<32x256xf32>
    %38 = arith.negf %37 : vector<32x256xf32>
    %39 = math.exp %38 : vector<32x256xf32>
    %cst = arith.constant 1.000000e+00 : f32
    %40 = vector.broadcast %cst : f32 to vector<32x256xf32>
    %41 = arith.addf %40, %39 : vector<32x256xf32>
    %42 = arith.divf %40, %41 : vector<32x256xf32>
    %43 = arith.mulf %37, %42 : vector<32x256xf32>
    %cst_11 = arith.constant dense<0.000000e+00> : vector<4x256xf32>
    %44 = tpu.matmul %7, %43, %cst_11 {dimension_numbers = #tpu.dot_dimension_numbers<[1], [0], [0], [1], [0, 0, 1, 1], [], []>} : vector<4x32xf32>, vector<32x256xf32>, vector<4x256xf32> -> vector<4x256xf32>
    %45 = vector.broadcast %10 : vector<4x1xf32> to vector<4x256xf32>
    %46 = arith.addf %44, %45 : vector<4x256xf32>
    %c0_12 = arith.constant 0 : index
    %c0_13 = arith.constant 0 : index
    %c0_14 = arith.constant 0 : index
    %47 = vector.load %arg8[%c0_12, %c0_13, %c0_14] : memref<1x4x256xf32, #tpu.memory_space<vmem>>, vector<1x4x256xf32>
    %48 = vector.shape_cast %47 : vector<1x4x256xf32> to vector<4x256xf32>
    %49 = vector.shape_cast %46 : vector<4x256xf32> to vector<1x4x256xf32>
    tpu.vector_store %arg8[%c0_12, %c0_13, %c0_14], %49 {strides = array<i32>} : memref<1x4x256xf32, #tpu.memory_space<vmem>>, vector<1x4x256xf32>,
    return
  }
  func.func @transform_0(%arg0: i32, %arg1: i32) -> i32 {
    %c0_i32 = arith.constant 0 : i32
    %c0_i32_0 = arith.constant 0 : i32
    return %c0_i32 : i32
  }
  func.func @transform_1(%arg0: i32, %arg1: i32) -> (i32, i32, i32) {
    %c0_i32 = arith.constant 0 : i32
    %c0_i32_0 = arith.constant 0 : i32
    return %arg0, %c0_i32, %arg1 : i32, i32, i32
  }
  func.func @transform_2(%arg0: i32, %arg1: i32) -> (i32, i32) {
    %c0_i32 = arith.constant 0 : i32
    %c0_i32_0 = arith.constant 0 : i32
    %c0_i32_1 = arith.constant 0 : i32
    return %c0_i32, %c0_i32_0 : i32, i32
  }
  func.func @transform_3(%arg0: i32, %arg1: i32) -> (i32, i32) {
    %c0_i32 = arith.constant 0 : i32
    %c0_i32_0 = arith.constant 0 : i32
    %c0_i32_1 = arith.constant 0 : i32
    return %c0_i32, %c0_i32_0 : i32, i32
  }
  func.func @transform_4(%arg0: i32, %arg1: i32) -> (i32, i32, i32) {
    %c0_i32 = arith.constant 0 : i32
    %c0_i32_0 = arith.constant 0 : i32
    %c0_i32_1 = arith.constant 0 : i32
    return %arg0, %c0_i32, %c0_i32_0 : i32, i32, i32
  }
  func.func @transform_5(%arg0: i32, %arg1: i32) -> (i32, i32) {
    %c0_i32 = arith.constant 0 : i32
    %c0_i32_0 = arith.constant 0 : i32
    %c0_i32_1 = arith.constant 0 : i32
    return %c0_i32, %c0_i32_0 : i32, i32
  }
  func.func @transform_6(%arg0: i32, %arg1: i32) -> (i32, i32, i32) {
    %c0_i32 = arith.constant 0 : i32
    %c0_i32_0 = arith.constant 0 : i32
    return %arg0, %c0_i32, %arg1 : i32, i32, i32
  }
}

</mosaic_0001>

<llo_original>
// kernel: score_forward.1
$region0: #{score_forward.1}
  #allocation0 [shape = 'u32[]', space=smem, size = 0x4, offset = 0x4, fixed_abs, tag = 'smem constant byte address 0x4 - core index']
  #allocation1 [shape = 'u32[144,128]{1,0:T(1,128)}', space=vmem, size = 0x12000, scoped, tag = 'internal scratch']
  %s0 = inlined_call_operand.vmem [shape: f32[2], index: 0, kind: input, shape index: {}]
  %s1 = inlined_call_operand.vmem [shape: f32[2,4,256], index: 1, kind: input, shape index: {}]
  %s2 = inlined_call_operand.vmem [shape: f32[32,4], index: 2, kind: input, shape index: {}]
  %s3 = inlined_call_operand.vmem [shape: f32[4,32], index: 3, kind: input, shape index: {}]
  %s4 = inlined_call_operand.vmem [shape: f32[2,32,1], index: 4, kind: input, shape index: {}]
  %s5 = inlined_call_operand.vmem [shape: f32[4,1], index: 5, kind: input, shape index: {}]
  %s6 = inlined_call_operand.vmem [shape: f32[2,4,256], index: 6, kind: output, shape index: {}]
  %s7 = sld [smem:[#allocation0]]
  $region61: #{score_forward.1} parent=0
    _
  %s9 = ssub.s32 1, %s7
  %s10 = scalar_select 0, %s9, %s7
  $region1: #{score_forward.1} parent=0
    #allocation2 [shape = 'u8[512]{0}', space=smem, size = 0x200, scoped, tag = 'input window, operand 0, single buffered']
    #allocation3 [shape = 's32[2]{0}', space=sflag, size = 0x8, scoped, tag = 'scoped memory for score_forward.1']
    %11 = vsyncpa [#allocation3], 0
    loop: start=0, step=1, limit=4
    $region2: #{score_forward.1} parent=1 // loop_pre_header
      _
    $region3: #{score_forward.1} parent=1 // loop_header
      %s13 = sphi 0, %s17
      %p14 = scmp.ge.s32.totalorder %s13, 4
      %s20 = sphi 0, %s32
      %s21 = sphi 0, %s28
      %s22 = sphi 0, %s20
      %s23 = sphi 0, %s21
      %s24 = sphi 0, %s22
      %s25 = sphi 0, %s23
      %s33 = sphi 0, %s33
      %s35 = sphi 0, %s33
      %s36 = sphi 0, %s35
      %s50 = sphi 0, %s36
      %s58 = sphi 0, %s60
      %s61 = sphi 0, %s58
      %s62 = sphi 0, %s61
      %s78 = sphi 0, %s62
      %s82 = sphi 0, %s82
      %s84 = sphi 0, %s82
      %s85 = sphi 0, %s84
      %s99 = sphi 0, %s85
      %s103 = sphi 0, %s103
      %s105 = sphi 0, %s103
      %s106 = sphi 0, %s105
      %s120 = sphi 0, %s106
      %s126 = sphi 0, %s128
      %s129 = sphi 0, %s126
      %s130 = sphi 0, %s129
      %s146 = sphi 0, %s130
      %s150 = sphi 0, %s150
      %s152 = sphi 0, %s150
      %s153 = sphi 0, %s152
      %s167 = sphi 0, %s153
      %s175 = sphi 0, %s177
      %s178 = sphi 0, %s175
      %s179 = sphi 0, %s178
      %s195 = sphi 0, %s179
    $region4: #{score_forward.1} parent=1 // loop_header_branch
      %16 = sbr.rel (%p14) target = $region8
    $region5: #{score_forward.1} parent=1 // loop_body
      %s18 = ssub.s32 %s13, 1
      %s19 = ssub.s32 %s13, 2
      %s26 = sadd.s32 1, %s21
      %p27 = scmp.ge.s32.totalorder %s26, 1
      %s28 = scalar_select %p27, 0, %s26
      %s29 = sadd.s32 1, %s20
      %s30 = scalar_select %p27, %s29, %s20
      %p31 = scmp.ge.s32.totalorder %s30, 2
      %s32 = scalar_select %p31, 0, %s30
      %s34 = sadd.s32 %s33, 1
      %p37 = scmp.eq.s32.totalorder %s13, 1
      %p38 = scmp.ne.s32.totalorder %s33, %s35
      %p39 = scmp.eq.s32.totalorder %s13, 0
      %p40 = por %p38, %p39
      %p41 = scmp.ne.s32.totalorder %s33, %s35
      %p42 = scmp.eq.s32.totalorder %s18, 1
      %p43 = por %p41, %p42
      %p44 = scmp.ne.s32.totalorder %s35, %s36
      %p45 = scmp.eq.s32.totalorder %s18, 0
      %p46 = por %p44, %p45
      %p47 = scmp.ne.s32.totalorder %s35, %s36
      %p48 = scmp.eq.s32.totalorder %s19, 1
      %p49 = por %p47, %p48
      %p51 = scmp.ne.s32.totalorder %s36, %s50
      %p52 = scmp.eq.s32.totalorder %s19, 0
      %p53 = por %p51, %p52
      %s54 = ssub.s32 %s20, %s32
      %s55 = ssub.s32 %s21, %s28
      %s56 = sor.u32 %s54, %s55
      %p57 = scmp.eq.s32.totalorder %s56, 0
      %s59 = sadd.s32 %s58, 1
      %s60 = scalar_select %p57, %s58, %s59
      %p63 = pneg %p57
      %p64 = scmp.eq.s32.totalorder %s13, 1
      %p65 = por %p63, %p64
      %p66 = scmp.ne.s32.totalorder %s58, %s61
      %p67 = scmp.eq.s32.totalorder %s13, 0
      %p68 = por %p66, %p67
      %p69 = scmp.ne.s32.totalorder %s58, %s61
      %p70 = scmp.eq.s32.totalorder %s18, 1
      %p71 = por %p69, %p70
      %p72 = scmp.ne.s32.totalorder %s61, %s62
      %p73 = scmp.eq.s32.totalorder %s18, 0
      %p74 = por %p72, %p73
      %p75 = scmp.ne.s32.totalorder %s61, %s62
      %p76 = scmp.eq.s32.totalorder %s19, 1
      %p77 = por %p75, %p76
      %p79 = scmp.ne.s32.totalorder %s62, %s78
      %p80 = scmp.eq.s32.totalorder %s19, 0
      %p81 = por %p79, %p80
      %s83 = sadd.s32 %s82, 1
      %p86 = scmp.eq.s32.totalorder %s13, 1
      %p87 = scmp.ne.s32.totalorder %s82, %s84
      %p88 = scmp.eq.s32.totalorder %s13, 0
      %p89 = por %p87, %p88
      %p90 = scmp.ne.s32.totalorder %s82, %s84
      %p91 = scmp.eq.s32.totalorder %s18, 1
      %p92 = por %p90, %p91
      %p93 = scmp.ne.s32.totalorder %s84, %s85
      %p94 = scmp.eq.s32.totalorder %s18, 0
      %p95 = por %p93, %p94
      %p96 = scmp.ne.s32.totalorder %s84, %s85
      %p97 = scmp.eq.s32.totalorder %s19, 1
      %p98 = por %p96, %p97
      %p100 = scmp.ne.s32.totalorder %s85, %s99
      %p101 = scmp.eq.s32.totalorder %s19, 0
      %p102 = por %p100, %p101
      %s104 = sadd.s32 %s103, 1
      %p107 = scmp.eq.s32.totalorder %s13, 1
      %p108 = scmp.ne.s32.totalorder %s103, %s105
      %p109 = scmp.eq.s32.totalorder %s13, 0
      %p110 = por %p108, %p109
      %p111 = scmp.ne.s32.totalorder %s103, %s105
      %p112 = scmp.eq.s32.totalorder %s18, 1
      %p113 = por %p111, %p112
      %p114 = scmp.ne.s32.totalorder %s105, %s106
      %p115 = scmp.eq.s32.totalorder %s18, 0
      %p116 = por %p114, %p115
      %p117 = scmp.ne.s32.totalorder %s105, %s106
      %p118 = scmp.eq.s32.totalorder %s19, 1
      %p119 = por %p117, %p118
      %p121 = scmp.ne.s32.totalorder %s106, %s120
      %p122 = scmp.eq.s32.totalorder %s19, 0
      %p123 = por %p121, %p122
      %s124 = ssub.s32 %s20, %s32
      %p125 = scmp.eq.s32.totalorder %s124, 0
      %s127 = sadd.s32 %s126, 1
      %s128 = scalar_select %p125, %s126, %s127
      %p131 = pneg %p125
      %p132 = scmp.eq.s32.totalorder %s13, 1
      %p133 = por %p131, %p132
      %p134 = scmp.ne.s32.totalorder %s126, %s129
      %p135 = scmp.eq.s32.totalorder %s13, 0
      %p136 = por %p134, %p135
      %p137 = scmp.ne.s32.totalorder %s126, %s129
      %p138 = scmp.eq.s32.totalorder %s18, 1
      %p139 = por %p137, %p138
      %p140 = scmp.ne.s32.totalorder %s129, %s130
      %p141 = scmp.eq.s32.totalorder %s18, 0
      %p142 = por %p140, %p141
      %p143 = scmp.ne.s32.totalorder %s129, %s130
      %p144 = scmp.eq.s32.totalorder %s19, 1
      %p145 = por %p143, %p144
      %p147 = scmp.ne.s32.totalorder %s130, %s146
      %p148 = scmp.eq.s32.totalorder %s19, 0
      %p149 = por %p147, %p148
      %s151 = sadd.s32 %s150, 1
      %p154 = scmp.eq.s32.totalorder %s13, 1
      %p155 = scmp.ne.s32.totalorder %s150, %s152
      %p156 = scmp.eq.s32.totalorder %s13, 0
      %p157 = por %p155, %p156
      %p158 = scmp.ne.s32.totalorder %s150, %s152
      %p159 = scmp.eq.s32.totalorder %s18, 1
      %p160 = por %p158, %p159
      %p161 = scmp.ne.s32.totalorder %s152, %s153
      %p162 = scmp.eq.s32.totalorder %s18, 0
      %p163 = por %p161, %p162
      %p164 = scmp.ne.s32.totalorder %s152, %s153
      %p165 = scmp.eq.s32.totalorder %s19, 1
      %p166 = por %p164, %p165
      %p168 = scmp.ne.s32.totalorder %s153, %s167
      %p169 = scmp.eq.s32.totalorder %s19, 0
      %p170 = por %p168, %p169
      %s171 = ssub.s32 %s20, %s32
      %s172 = ssub.s32 %s21, %s28
      %s173 = sor.u32 %s171, %s172
      %p174 = scmp.eq.s32.totalorder %s173, 0
      %s176 = sadd.s32 %s175, 1
      %s177 = scalar_select %p174, %s175, %s176
      %p180 = pneg %p174
      %p181 = scmp.eq.s32.totalorder %s13, 1
      %p182 = por %p180, %p181
      %p183 = scmp.ne.s32.totalorder %s175, %s178
      %p184 = scmp.eq.s32.totalorder %s13, 0
      %p185 = por %p183, %p184
      %p186 = scmp.ne.s32.totalorder %s175, %s178
      %p187 = scmp.eq.s32.totalorder %s18, 1
      %p188 = por %p186, %p187
      %p189 = scmp.ne.s32.totalorder %s178, %s179
      %p190 = scmp.eq.s32.totalorder %s18, 0
      %p191 = por %p189, %p190
      %p192 = scmp.ne.s32.totalorder %s178, %s179
      %p193 = scmp.eq.s32.totalorder %s19, 1
      %p194 = por %p192, %p193
      %p196 = scmp.ne.s32.totalorder %s179, %s195
      %p197 = scmp.eq.s32.totalorder %s19, 0
      %p198 = por %p196, %p197
      %p199 = scmp.le.s32.totalorder 1, %s13
      %p200 = scmp.lt.s32.totalorder %s13, 3
      %p201 = pnand %p199, %p200
      %p202 = pneg %p201
      // Predicated region
      $region9: #{score_forward.1} parent=5 // pred_check
        _
      $region10: #{score_forward.1} parent=5 // pred_check_branch
        %204 = sbr.rel (%p201) target = $region12
      $region11: #{score_forward.1} parent=5 // pred_region
        %s205 = ssub.s32 %s13, 1
        // Predicated region
        $region13: #{score_forward.1} parent=11 // pred_check
          %p206 = pneg %p46
        $region14: #{score_forward.1} parent=11 // pred_check_branch
          %208 = sbr.rel (%p206) target = $region16
        $region15: #{score_forward.1} parent=11 // pred_region
          %s210 = ssub.s32 16, 16
          %211 = vsyncadd [#allocation3], %s210
          %s213 = sshll.u32 %s0, 4
          %s214 = int_to_ptr.vmem [resolvable:$true] %s213
          %216 = dma.vmem_to_smem %s214, 16, [#allocation2], [#allocation3]
        $region16: #{score_forward.1} parent=11 // pred_fallthru
          _
        // Predicated region
        $region17: #{score_forward.1} parent=11 // pred_check
          %p217 = pneg %p95
        $region18: #{score_forward.1} parent=11 // pred_check_branch
          %219 = sbr.rel (%p217) target = $region20
        $region19: #{score_forward.1} parent=11 // pred_region
          _
        $region20: #{score_forward.1} parent=11 // pred_fallthru
          _
        // Predicated region
        $region21: #{score_forward.1} parent=11 // pred_check
          %p220 = pneg %p116
        $region22: #{score_forward.1} parent=11 // pred_check_branch
          %222 = sbr.rel (%p220) target = $region24
        $region23: #{score_forward.1} parent=11 // pred_region
          _
        $region24: #{score_forward.1} parent=11 // pred_fallthru
          _
        // Predicated region
        $region25: #{score_forward.1} parent=11 // pred_check
          %p223 = pneg %p163
        $region26: #{score_forward.1} parent=11 // pred_check_branch
          %225 = sbr.rel (%p223) target = $region28
        $region27: #{score_forward.1} parent=11 // pred_region
          _
        $region28: #{score_forward.1} parent=11 // pred_fallthru
          _
      $region12: #{score_forward.1} parent=5 // pred_fallthru
        _
      %p226 = scmp.lt.s32.totalorder %s13, 2
      // Predicated region
      $region29: #{score_forward.1} parent=5 // pred_check
        %p227 = pneg %p226
      $region30: #{score_forward.1} parent=5 // pred_check_branch
        %229 = sbr.rel (%p227) target = $region32
      $region31: #{score_forward.1} parent=5 // pred_region
        // Predicated region
        $region33: #{score_forward.1} parent=31 // pred_check
          %p230 = pneg %p68
        $region34: #{score_forward.1} parent=31 // pred_check_branch
          %232 = sbr.rel (%p230) target = $region36
        $region35: #{score_forward.1} parent=31 // pred_region
          %s233 = smul.u32 2, %s21
          %p234 = scmp.lt.s32.totalorder %s20, 1
          %s235 = scalar_select %p234, %s20, 1
          %p236 = scmp.lt.s32.totalorder %s233, 1
          %s237 = scalar_select %p236, %s233, 1
          %s238 = smul.addr %s235, 2
          %s239 = sadd.s32 %s237, %s238
          %s240 = smul.addr %s239, 4
          %s241 = scalar_lea.vmem %s1, %s240
          %s242 = smul.u32 2, %s21
        $region36: #{score_forward.1} parent=31 // pred_fallthru
          _
        // Predicated region
        $region37: #{score_forward.1} parent=31 // pred_check
          %p243 = pneg %p136
        $region38: #{score_forward.1} parent=31 // pred_check_branch
          %245 = sbr.rel (%p243) target = $region40
        $region39: #{score_forward.1} parent=31 // pred_region
          %p246 = scmp.lt.s32.totalorder %s20, 1
          %s247 = scalar_select %p246, %s20, 1
          %s248 = smul.addr %s247, 4
          %s249 = smul.addr %s248, 8
          %s250 = scalar_lea.vmem %s4, %s249
        $region40: #{score_forward.1} parent=31 // pred_fallthru
          _
      $region32: #{score_forward.1} parent=5 // pred_fallthru
        _
      %p251 = scmp.le.s32.totalorder 1, %s13
      %p252 = scmp.lt.s32.totalorder %s13, 3
      %p253 = pnand %p251, %p252
      %p254 = pneg %p253
      // Predicated region
      $region41: #{score_forward.1} parent=5 // pred_check
        _
      $region42: #{score_forward.1} parent=5 // pred_check_branch
        %256 = sbr.rel (%p253) target = $region44
      $region43: #{score_forward.1} parent=5 // pred_region
        %s257 = ssub.s32 %s13, 1
        // Predicated region
        $region45: #{score_forward.1} parent=43 // pred_check
          %p258 = pneg %p46
        $region46: #{score_forward.1} parent=43 // pred_check_branch
          %260 = sbr.rel (%p258) target = $region48
        $region47: #{score_forward.1} parent=43 // pred_region
          %261 = dma.done [#allocation3], 16
        $region48: #{score_forward.1} parent=43 // pred_fallthru
          _
        %262 = sfence
        %p263 = pneg %p46
        %p264 = pneg %p43
        %s265 = smul.u32 2, %s23
        %p266 = scmp.lt.s32.totalorder %s22, 1
        %s267 = scalar_select %p266, %s22, 1
        %p268 = scmp.lt.s32.totalorder %s265, 1
        %s269 = scalar_select %p268, %s265, 1
        %s270 = smul.addr %s267, 2
        %s271 = sadd.s32 %s269, %s270
        %s272 = smul.addr %s271, 4
        %s273 = scalar_lea.vmem %s1, %s272
        %p274 = pneg %p74
        %p275 = pneg %p71
        %p276 = pneg %p95
        %p277 = pneg %p92
        %p278 = pneg %p116
        %p279 = pneg %p113
        %p280 = scmp.lt.s32.totalorder %s22, 1
        %s281 = scalar_select %p280, %s22, 1
        %s282 = smul.addr %s281, 4
        %s283 = smul.addr %s282, 8
        %s284 = scalar_lea.vmem %s4, %s283
        %p285 = pneg %p142
        %p286 = pneg %p139
        %p287 = pneg %p163
        %p288 = pneg %p160
        %p289 = pneg %p191
        %p290 = pneg %p188
        %s291 = smul.u32 2, %s23
        %p292 = scmp.lt.s32.totalorder %s22, 1
        %s293 = scalar_select %p292, %s22, 1
        %p294 = scmp.lt.s32.totalorder %s291, 1
        %s295 = scalar_select %p294, %s291, 1
        %s296 = smul.addr %s293, 2
        %s297 = sadd.s32 %s295, %s296
        %s298 = smul.addr %s297, 4
        %s299 = scalar_lea.vmem %s6, %s298
        %s300 = smul.u32 2, %s23
        %p301 = scmp.lt.s32.totalorder %s22, 1
        %s302 = scalar_select %p301, %s22, 1
        %p303 = scmp.lt.s32.totalorder %s300, 1
        %s304 = scalar_select %p303, %s300, 1
        %s305 = smul.addr %s302, 2
        %s306 = sadd.s32 %s304, %s305
        %s307 = smul.addr %s306, 4
        %s308 = scalar_lea.vmem %s1, %s307
        %s309 = smul.u32 2, %s23
        %p310 = scmp.lt.s32.totalorder %s22, 1
        %s311 = scalar_select %p310, %s22, 1
        %s312 = smul.addr %s311, 4
        %s313 = smul.addr %s312, 8
        %s314 = scalar_lea.vmem %s4, %s313
        %s315 = smul.u32 2, %s23
        %p316 = scmp.lt.s32.totalorder %s22, 1
        %s317 = scalar_select %p316, %s22, 1
        %p318 = scmp.lt.s32.totalorder %s315, 1
        %s319 = scalar_select %p318, %s315, 1
        %s320 = smul.addr %s317, 2
        %s321 = sadd.s32 %s319, %s320
        %s322 = smul.addr %s321, 4
        %s323 = scalar_lea.vmem %s6, %s322
        %s324 = smul.u32 2, %s23
        %v325 = vld [vmem:[%s2] sm:$0xff]
        %v326 = vld [vmem:[%s2 + $0x8] sm:$0xff]
        %v327 = vld [vmem:[%s2 + $0x10] sm:$0xff]
        %v328 = vld [vmem:[%s2 + $0x18] sm:$0xff]
        %v329 = vld [vmem:[%s314] sm:$0xff]
        %v330 = vld [vmem:[%s314 + $0x8] sm:$0xff]
        %v331 = vld [vmem:[%s314 + $0x10] sm:$0xff]
        %v332 = vld [vmem:[%s314 + $0x18] sm:$0xff]
        %s333 = sld [smem:[#allocation2 + %s22]]
        %v334 = vld [vmem:[%s3] sm:$0xf]
        %v335 = vstv %s333
        %v336 = vmul.f32 %v334, %v335
        %v337 = vld [vmem:[%s5] sm:$0xf]
        %v338 = vmul.f32 %v337, %v335
        %v339 = vld [vmem:[%s308] sm:$0xff]
        %341 = vset.pattern.permute.xlu0 0
        %342 = vperm.xlu0 %341, %v325
        %v343 = vpop.permute.xlu0 %342
        %346 = vset.pattern.permute.xlu0 0
        %347 = vperm.xlu0 %346, %v326
        %v348 = vpop.permute.xlu0 %347
        %351 = vset.pattern.permute.xlu0 0
        %352 = vperm.xlu0 %351, %v327
        %v353 = vpop.permute.xlu0 %352
        %356 = vset.pattern.permute.xlu0 0
        %357 = vperm.xlu0 %356, %v328
        %v358 = vpop.permute.xlu0 %357
        %v361 = vlaneseq
        %v362 = vshrl.u32 %v361, 7
        %v363 = vsub.s32 0, %v362
        %v364 = vrot.slane %v339, %v363
        %v365 = vlaneseq
        %v366 = vshrl.u32 %v365, 7
        %v367 = vsub.s32 4, %v366
        %v368 = vrot.slane %v339, %v367
        %v371 = vlaneseq
        %v372 = vshrl.u32 %v371, 7
        %v373 = vsub.s32 0, %v372
        %v374 = vrot.slane %v364, %v373
        %v375 = vlaneseq
        %v376 = vshrl.u32 %v375, 7
        %v377 = vsub.s32 0, %v376
        %v378 = vrot.slane %v368, %v377
        %v379 = vmul.f32 %v343, %v374
        %v380 = vmul.f32 %v343, %v378
        %v381 = vmul.f32 %v348, %v374
        %v382 = vmul.f32 %v348, %v378
        %v383 = vmul.f32 %v353, %v374
        %v384 = vmul.f32 %v353, %v378
        %v385 = vmul.f32 %v358, %v374
        %v386 = vmul.f32 %v358, %v378
        %387 = vset.pattern.permute.xlu0 1
        %388 = vperm.xlu0 %387, %v325
        %v389 = vpop.permute.xlu0 %388
        %391 = vset.pattern.permute.xlu0 1
        %392 = vperm.xlu0 %391, %v326
        %v393 = vpop.permute.xlu0 %392
        %395 = vset.pattern.permute.xlu0 1
        %396 = vperm.xlu0 %395, %v327
        %v397 = vpop.permute.xlu0 %396
        %399 = vset.pattern.permute.xlu0 1
        %400 = vperm.xlu0 %399, %v328
        %v401 = vpop.permute.xlu0 %400
        %v403 = vlaneseq
        %v404 = vshrl.u32 %v403, 7
        %v405 = vsub.s32 1, %v404
        %v406 = vrot.slane %v339, %v405
        %v407 = vlaneseq
        %v408 = vshrl.u32 %v407, 7
        %v409 = vsub.s32 5, %v408
        %v410 = vrot.slane %v339, %v409
        %v413 = vlaneseq
        %v414 = vshrl.u32 %v413, 7
        %v415 = vsub.s32 1, %v414
        %v416 = vrot.slane %v406, %v415
        %v417 = vlaneseq
        %v418 = vshrl.u32 %v417, 7
        %v419 = vsub.s32 1, %v418
        %v420 = vrot.slane %v410, %v419
        %v421 = vmul.f32 %v389, %v416
        %v422 = vmul.f32 %v389, %v420
        %v423 = vmul.f32 %v393, %v416
        %v424 = vmul.f32 %v393, %v420
        %v425 = vmul.f32 %v397, %v416
        %v426 = vmul.f32 %v397, %v420
        %v427 = vmul.f32 %v401, %v416
        %v428 = vmul.f32 %v401, %v420
        %v429 = vadd.f32 %v379, %v421
        %v430 = vadd.f32 %v380, %v422
        %v431 = vadd.f32 %v381, %v423
        %v432 = vadd.f32 %v382, %v424
        %v433 = vadd.f32 %v383, %v425
        %v434 = vadd.f32 %v384, %v426
        %v435 = vadd.f32 %v385, %v427
        %v436 = vadd.f32 %v386, %v428
        %437 = vset.pattern.permute.xlu0 2
        %438 = vperm.xlu0 %437, %v325
        %v439 = vpop.permute.xlu0 %438
        %441 = vset.pattern.permute.xlu0 2
        %442 = vperm.xlu0 %441, %v326
        %v443 = vpop.permute.xlu0 %442
        %445 = vset.pattern.permute.xlu0 2
        %446 = vperm.xlu0 %445, %v327
        %v447 = vpop.permute.xlu0 %446
        %449 = vset.pattern.permute.xlu0 2
        %450 = vperm.xlu0 %449, %v328
        %v451 = vpop.permute.xlu0 %450
        %v453 = vlaneseq
        %v454 = vshrl.u32 %v453, 7
        %v455 = vsub.s32 2, %v454
        %v456 = vrot.slane %v339, %v455
        %v457 = vlaneseq
        %v458 = vshrl.u32 %v457, 7
        %v459 = vsub.s32 6, %v458
        %v460 = vrot.slane %v339, %v459
        %v463 = vlaneseq
        %v464 = vshrl.u32 %v463, 7
        %v465 = vsub.s32 2, %v464
        %v466 = vrot.slane %v456, %v465
        %v467 = vlaneseq
        %v468 = vshrl.u32 %v467, 7
        %v469 = vsub.s32 2, %v468
        %v470 = vrot.slane %v460, %v469
        %v471 = vmul.f32 %v439, %v466
        %v472 = vmul.f32 %v439, %v470
        %v473 = vmul.f32 %v443, %v466
        %v474 = vmul.f32 %v443, %v470
        %v475 = vmul.f32 %v447, %v466
        %v476 = vmul.f32 %v447, %v470
        %v477 = vmul.f32 %v451, %v466
        %v478 = vmul.f32 %v451, %v470
        %v479 = vadd.f32 %v429, %v471
        %v480 = vadd.f32 %v430, %v472
        %v481 = vadd.f32 %v431, %v473
        %v482 = vadd.f32 %v432, %v474
        %v483 = vadd.f32 %v433, %v475
        %v484 = vadd.f32 %v434, %v476
        %v485 = vadd.f32 %v435, %v477
        %v486 = vadd.f32 %v436, %v478
        %487 = vset.pattern.permute.xlu0 3
        %488 = vperm.xlu0 %487, %v325
        %v489 = vpop.permute.xlu0 %488
        %491 = vset.pattern.permute.xlu0 3
        %492 = vperm.xlu0 %491, %v326
        %v493 = vpop.permute.xlu0 %492
        %495 = vset.pattern.permute.xlu0 3
        %496 = vperm.xlu0 %495, %v327
        %v497 = vpop.permute.xlu0 %496
        %499 = vset.pattern.permute.xlu0 3
        %500 = vperm.xlu0 %499, %v328
        %v501 = vpop.permute.xlu0 %500
        %v503 = vlaneseq
        %v504 = vshrl.u32 %v503, 7
        %v505 = vsub.s32 3, %v504
        %v506 = vrot.slane %v339, %v505
        %v507 = vlaneseq
        %v508 = vshrl.u32 %v507, 7
        %v509 = vsub.s32 7, %v508
        %v510 = vrot.slane %v339, %v509
        %v513 = vlaneseq
        %v514 = vshrl.u32 %v513, 7
        %v515 = vsub.s32 3, %v514
        %v516 = vrot.slane %v506, %v515
        %v517 = vlaneseq
        %v518 = vshrl.u32 %v517, 7
        %v519 = vsub.s32 3, %v518
        %v520 = vrot.slane %v510, %v519
        %v521 = vmul.f32 %v489, %v516
        %v522 = vmul.f32 %v489, %v520
        %v523 = vmul.f32 %v493, %v516
        %v524 = vmul.f32 %v493, %v520
        %v525 = vmul.f32 %v497, %v516
        %v526 = vmul.f32 %v497, %v520
        %v527 = vmul.f32 %v501, %v516
        %v528 = vmul.f32 %v501, %v520
        %v529 = vadd.f32 %v479, %v521
        %v530 = vadd.f32 %v480, %v522
        %v531 = vadd.f32 %v481, %v523
        %v532 = vadd.f32 %v482, %v524
        %v533 = vadd.f32 %v483, %v525
        %v534 = vadd.f32 %v484, %v526
        %v535 = vadd.f32 %v485, %v527
        %v536 = vadd.f32 %v486, %v528
        %538 = vset.pattern.permute.xlu0 0
        %539 = vperm.xlu0 %538, %v329
        %v540 = vpop.permute.xlu0 %539
        %543 = vset.pattern.permute.xlu0 0
        %544 = vperm.xlu0 %543, %v330
        %v545 = vpop.permute.xlu0 %544
        %548 = vset.pattern.permute.xlu0 0
        %549 = vperm.xlu0 %548, %v331
        %v550 = vpop.permute.xlu0 %549
        %553 = vset.pattern.permute.xlu0 0
        %554 = vperm.xlu0 %553, %v332
        %v555 = vpop.permute.xlu0 %554
        %v557 = vadd.f32 %v529, %v540
        %v558 = vadd.f32 %v530, %v540
        %v559 = vadd.f32 %v531, %v545
        %v560 = vadd.f32 %v532, %v545
        %v561 = vadd.f32 %v533, %v550
        %v562 = vadd.f32 %v534, %v550
        %v563 = vadd.f32 %v535, %v555
        %v564 = vadd.f32 %v536, %v555
        %v565 = vxor.u32 %v557, 2147483648
        %v566 = vxor.u32 %v558, 2147483648
        %v567 = vxor.u32 %v559, 2147483648
        %v568 = vxor.u32 %v560, 2147483648
        %v569 = vxor.u32 %v561, 2147483648
        %v570 = vxor.u32 %v562, 2147483648
        %v571 = vxor.u32 %v563, 2147483648
        %v572 = vxor.u32 %v564, 2147483648
        %v573 = vmul.f32 %v565, 1.442695
        %v574 = vpow.pop %v573
        %v575 = vmul.f32 %v566, 1.442695
        %v576 = vpow.pop %v575
        %v577 = vmul.f32 %v567, 1.442695
        %v578 = vpow.pop %v577
        %v579 = vmul.f32 %v568, 1.442695
        %v580 = vpow.pop %v579
        %v581 = vmul.f32 %v569, 1.442695
        %v582 = vpow.pop %v581
        %v583 = vmul.f32 %v570, 1.442695
        %v584 = vpow.pop %v583
        %v585 = vmul.f32 %v571, 1.442695
        %v586 = vpow.pop %v585
        %v587 = vmul.f32 %v572, 1.442695
        %v588 = vpow.pop %v587
        %v589 = vadd.f32 %v574, 1.0
        %v590 = vadd.f32 %v576, 1.0
        %v591 = vadd.f32 %v578, 1.0
        %v592 = vadd.f32 %v580, 1.0
        %v593 = vadd.f32 %v582, 1.0
        %v594 = vadd.f32 %v584, 1.0
        %v595 = vadd.f32 %v586, 1.0
        %v596 = vadd.f32 %v588, 1.0
        %v597 = vrcp.pop %v589
        %v598 = vmul.f32 1.0, %v597
        %v599 = vrcp.pop %v590
        %v600 = vmul.f32 1.0, %v599
        %v601 = vrcp.pop %v591
        %v602 = vmul.f32 1.0, %v601
        %v603 = vrcp.pop %v592
        %v604 = vmul.f32 1.0, %v603
        %v605 = vrcp.pop %v593
        %v606 = vmul.f32 1.0, %v605
        %v607 = vrcp.pop %v594
        %v608 = vmul.f32 1.0, %v607
        %v609 = vrcp.pop %v595
        %v610 = vmul.f32 1.0, %v609
        %v611 = vrcp.pop %v596
        %v612 = vmul.f32 1.0, %v611
        %v613 = vmul.f32 %v557, %v598
        %v614 = vmul.f32 %v558, %v600
        %v615 = vmul.f32 %v559, %v602
        %v616 = vmul.f32 %v560, %v604
        %v617 = vmul.f32 %v561, %v606
        %v618 = vmul.f32 %v562, %v608
        %v619 = vmul.f32 %v563, %v610
        %v620 = vmul.f32 %v564, %v612
        %622 = vset.pattern.permute.xlu0 0
        %623 = vperm.xlu0 %622, %v338
        %v624 = vpop.permute.xlu0 %623
        %vm626 = vcmask 261120
        %v628 = vsel %vm626, %v336, 0
        %630 = vmatprep.subr.mxu0 %v614
        %631 = vmatpush1.msra.mxu0 %v613
        %632 = vmatprep.subr.mxu0 %v616
        %633 = vmatpush1.msra.mxu0 %v615
        %634 = vmatprep.subr.mxu0 %v618
        %635 = vmatpush1.msra.mxu0 %v617
        %636 = vmatprep.subr.mxu0 %v620
        %637 = vmatpush1.msra.mxu0 %v619
        %638 = vmatprep.subr.mxu0 0.0
        %639 = vmatpush1.msra.mxu0 0.0
        %640 = vmatprep.subr.mxu0 0.0
        %641 = vmatpush1.msra.mxu0 0.0
        %642 = vmatprep.subr.mxu0 0.0
        %643 = vmatpush1.msra.mxu0 0.0
        %644 = vmatprep.subr.mxu0 0.0
        %645 = vmatpush1.msra.mxu0 0.0
        %646 = vmatprep.subr.mxu0 0.0
        %647 = vmatpush1.msra.mxu0 0.0
        %648 = vmatprep.subr.mxu0 0.0
        %649 = vmatpush1.msra.mxu0 0.0
        %650 = vmatprep.subr.mxu0 0.0
        %651 = vmatpush1.msra.mxu0 0.0
        %652 = vmatprep.subr.mxu0 0.0
        %653 = vmatpush1.msra.mxu0 0.0
        %654 = vmatprep.subr.mxu0 0.0
        %655 = vmatpush1.msra.mxu0 0.0
        %656 = vmatprep.subr.mxu0 0.0
        %657 = vmatpush1.msra.mxu0 0.0
        %658 = vmatprep.subr.mxu0 0.0
        %659 = vmatpush1.msra.mxu0 0.0
        %660 = vmatprep.subr.mxu0 0.0
        %661 = vmatpush1.msra.mxu0 0.0
        %662 = vmatprep.subr.mxu0 0.0
        %663 = vmatpush1.msra.mxu0 0.0
        %664 = vmatprep.subr.mxu0 0.0
        %665 = vmatpush1.msra.mxu0 0.0
        %666 = vmatprep.subr.mxu0 0.0
        %667 = vmatpush1.msra.mxu0 0.0
        %668 = vmatprep.subr.mxu0 0.0
        %669 = vmatpush1.msra.mxu0 0.0
        %670 = vmatprep.subr.mxu0 0.0
        %671 = vmatpush1.msra.mxu0 0.0
        %672 = vmatprep.subr.mxu0 0.0
        %673 = vmatpush1.msra.mxu0 0.0
        %674 = vmatprep.subr.mxu0 0.0
        %675 = vmatpush1.msra.mxu0 0.0
        %676 = vmatprep.subr.mxu0 0.0
        %677 = vmatpush1.msra.mxu0 0.0
        %678 = vmatprep.subr.mxu0 0.0
        %679 = vmatpush1.msra.mxu0 0.0
        %680 = vmatprep.subr.mxu0 0.0
        %681 = vmatpush1.msra.mxu0 0.0
        %682 = vmatprep.subr.mxu0 0.0
        %683 = vmatpush1.msra.mxu0 0.0
        %684 = vmatprep.subr.mxu0 0.0
        %685 = vmatpush1.msra.mxu0 0.0
        %686 = vmatprep.subr.mxu0 0.0
        %687 = vmatpush1.msra.mxu0 0.0
        %688 = vmatprep.subr.mxu0 0.0
        %689 = vmatpush1.msra.mxu0 0.0
        %690 = vmatprep.subr.mxu0 0.0
        %691 = vmatpush1.msra.mxu0 0.0
        %692 = vmatprep.subr.mxu0 0.0
        %693 = vmatpush1.msra.mxu0 0.0
        %694 = vmatprep.mubr.f32.mxu0 0.0
        %695 = vmatmul.mubr.f32.gmra.mrb[0].mxu0 %v628
        %v696 = vpop.f32.mrb[0].mxu0
        %v697 = vadd.f32 %v624, %v696
        %v698 = vpop.f32.mrb[0].mxu0
        %v699 = vadd.f32 %v624, %v698
        %700 = vdwg.mxu0
        %v703 = vcombine.low %v697, %v699
        %705 = vst [vmem:[%s323] sm:$0xff] %v703
        %s706 = smul.u32 2, %s23
        %p707 = scmp.lt.s32.totalorder %s22, 1
        %s708 = scalar_select %p707, %s22, 1
        %p709 = scmp.lt.s32.totalorder %s706, 1
        %s710 = scalar_select %p709, %s706, 1
        %s711 = smul.addr %s708, 2
        %s712 = sadd.s32 %s710, %s711
        %s713 = smul.addr %s712, 4
        %s714 = scalar_lea.vmem %s6, %s713
        // Predicated region
        $region49: #{score_forward.1} parent=43 // pred_check
          %p715 = pneg %p188
        $region50: #{score_forward.1} parent=43 // pred_check_branch
          %717 = sbr.rel (%p715) target = $region52
        $region51: #{score_forward.1} parent=43 // pred_region
          %s718 = smul.u32 2, %s23
        $region52: #{score_forward.1} parent=43 // pred_fallthru
          _
      $region44: #{score_forward.1} parent=5 // pred_fallthru
        _
      %p719 = scmp.le.s32.totalorder 2, %s13
      // Predicated region
      $region53: #{score_forward.1} parent=5 // pred_check
        %p720 = pneg %p719
      $region54: #{score_forward.1} parent=5 // pred_check_branch
        %722 = sbr.rel (%p720) target = $region56
      $region55: #{score_forward.1} parent=5 // pred_region
        %s723 = ssub.s32 %s13, 2
        // Predicated region
        $region57: #{score_forward.1} parent=55 // pred_check
          %p724 = pneg %p194
        $region58: #{score_forward.1} parent=55 // pred_check_branch
          %726 = sbr.rel (%p724) target = $region60
        $region59: #{score_forward.1} parent=55 // pred_region
          %s727 = smul.u32 2, %s25
          %p728 = scmp.lt.s32.totalorder %s24, 1
          %s729 = scalar_select %p728, %s24, 1
          %p730 = scmp.lt.s32.totalorder %s727, 1
          %s731 = scalar_select %p730, %s727, 1
          %s732 = smul.addr %s729, 2
          %s733 = sadd.s32 %s731, %s732
          %s734 = smul.addr %s733, 4
          %s735 = scalar_lea.vmem %s6, %s734
        $region60: #{score_forward.1} parent=55 // pred_fallthru
          _
      $region56: #{score_forward.1} parent=5 // pred_fallthru
        _
    $region6: #{score_forward.1} parent=1 // loop_footer
      %s17 = sadd.s32 1, %s13
    $region7: #{score_forward.1} parent=1 // loop_footer_branch
      %12 = sbr.rel target = $region3
    $region8: #{score_forward.1} parent=1 // loop_exit
      _
    %736 = vsyncpa [#allocation3], 1
    %s737 = scalar_lea.sflag [#allocation3], 1
    %738 = vsyncpa %s737, 1

</llo_original>
